<compile_context>
chip_gen: v7x
topology: tpu7x:2x2x1
jax: 0.10.0
libtpu: 0.0.40
codegen_flags: <defaults>
</compile_context>

<pallas_src>
import functools

import numpy as np
import jax
import jax.numpy as jnp
from jax.experimental import pallas as pl
from jax.experimental.pallas import tpu as pltpu


def _round_up(a, b):
    return ((a + b - 1) // b) * b


# ----------------------------------------------------------------------------
# Deterministic sinc filter init (same math as the PyTorch module __init__).
# ----------------------------------------------------------------------------
def build_sinc_filter(kernel_size, cutoff):
    # NOTE: the `0.08 * np.cos(4 * np.pi * M)` term (a constant for integer M)
    # reproduces the upstream Wave-U-Net / PyTorch code verbatim; it is NOT the
    # Blackman `0.08 * cos(4*pi*i/M)` term.  Kept intentionally for parity.
    assert kernel_size % 2 == 1
    M = kernel_size - 1
    filt = np.zeros(kernel_size, dtype=np.float32)
    for i in range(kernel_size):
        if i == M // 2:
            filt[i] = 2 * np.pi * cutoff
        else:
            filt[i] = (np.sin(2 * np.pi * cutoff * (i - M // 2)) / (i - M // 2)
                       * (0.42 - 0.5 * np.cos(2 * np.pi * i / M)
                          + 0.08 * np.cos(4 * np.pi * M)))
    filt = filt / np.sum(filt)
    return filt


def sinc_lowpass_taps(kernel_size, stride):
    """Channel-shared 1-D sinc lowpass taps (numpy, shape (K,))."""
    return build_sinc_filter(kernel_size, 0.5 / stride)


# ----------------------------------------------------------------------------
# Generic polyphase-correlation Pallas kernel.
#
#   inputs : xph  (n_in, R, T_in)  -- phase slabs, rows = packed N*C (+pad)
#   output :      (n_out, R, T_out_total)
#   taps[oi][ii] = tuple of (lane_offset, coefficient)   (static Python)
#
#   out[oi, :, j] = sum_ii sum_(off,c) xph[ii, :, j + off] * c
#
# The grid is (row_tiles, time_tiles).  Each input is passed twice: once as the
# main (row_tile, t_out) tile and once as a 128-lane halo block that reads the
# start of the *next* time tile, so in-kernel tap reads never leave the staged
# VMEM scratch and are always unit-stride along lanes.
# ----------------------------------------------------------------------------
def _poly_corr_kernel(x_ref, h_ref, o_ref, *bufs, taps, n_in, n_out, t_out):
    # Stage main tile + 128-lane right halo contiguously in VMEM.
    for ii in range(n_in):
        bufs[ii][:, :t_out] = x_ref[ii]
        bufs[ii][:, t_out:] = h_ref[ii]
    # Dense multi-tap correlation; taps are compile-time scalars -> pure VPU FMAs.
    for oi in range(n_out):
        acc = jnp.zeros((o_ref.shape[1], t_out), jnp.float32)
        for ii in range(n_in):
            for off, coef in taps[oi][ii]:
                acc = acc + bufs[ii][:, pl.ds(off, t_out)] * coef
        o_ref[oi] = acc.astype(o_ref.dtype)


def _poly_corr(xph, taps, *, n_out, t_out_total, row_tile, t_out):
    n_in, rows, _ = xph.shape
    n_r = rows // row_tile
    n_t = t_out_total // t_out
    halo_blocks = t_out // 128  # halo block index units (block width = 128 lanes)

    kern = functools.partial(_poly_corr_kernel, taps=taps,
                             n_in=n_in, n_out=n_out, t_out=t_out)
    return pl.pallas_call(
        kern,
        out_shape=jax.ShapeDtypeStruct((n_out, rows, t_out_total), jnp.float32),
        grid_spec=pltpu.PrefetchScalarGridSpec(
            num_scalar_prefetch=0,
            grid=(n_r, n_t),
            in_specs=[
                # main (row_tile, t_out) tile of every phase
                pl.BlockSpec((n_in, row_tile, t_out), lambda r, t: (0, r, t)),
                # 128-lane halo = start of the next time tile (zero-padded slab)
                pl.BlockSpec((n_in, row_tile, 128),
                             lambda r, t: (0, r, (t + 1) * halo_blocks)),
            ],
            out_specs=pl.BlockSpec((n_out, row_tile, t_out),
                                   lambda r, t: (0, r, t)),
            scratch_shapes=[pltpu.VMEM((row_tile, t_out + 128), jnp.float32)
                            for _ in range(n_in)],
        ),
        compiler_params=pltpu.CompilerParams(
            dimension_semantics=("parallel", "parallel"),
            vmem_limit_bytes=32 * 1024 * 1024,
        ),
    )(xph, xph)


# ----------------------------------------------------------------------------
# Forward pass (mirrors ResampleSinc.forward exactly).
# ----------------------------------------------------------------------------
def resample_sinc_forward(x, filter_taps, *, kernel_size, stride,
                          padding="reflect", transpose=False,
                          row_tile_cap=64, time_tile_cap=1024):
    """x: (N, C, W) float32.  filter_taps: numpy (K,) channel-shared taps."""
    N, C, W = x.shape
    K = kernel_size
    s = stride
    f = np.asarray(filter_taps, dtype=np.float32).reshape(K)
    # TODO(synk): per-channel *trainable* filters would need the (C, K) filter
    # passed as a kernel operand instead of being baked as compile-time taps.

    if padding != "valid":
        num_pad = (K - 1) // 2
        xp = jnp.pad(x, ((0, 0), (0, 0), (num_pad, num_pad)), mode=padding)
    else:
        xp = x
    L = xp.shape[2]

    NC = N * C
    xp2 = xp.reshape(NC, L).astype(jnp.float32)

    # Pack N*C onto the sublane axis.
    row_tile = min(row_tile_cap, _round_up(NC, 8))
    rows_pad = _round_up(NC, row_tile)

    if not transpose:
        # F.conv1d(xp, filter, stride=s, groups=C), polyphase form.
        assert W % s == 1              # torch module constraint
        out_len = (L - K) // s + 1
        kp = [(K - p + s - 1) // s for p in range(s)]     # taps per phase
        assert max(kp) - 1 <= 128, "kernel_size too large for 128-lane halo"

        t_out = min(time_tile_cap, _round_up(out_len, 128))
        t_out_total = _round_up(out_len, t_out)
        n_t = t_out_total // t_out
        t_in_total = (n_t + 1) * t_out                    # +1 tile: halo & zero pad

        # Deinterleave into `stride` phases (one XLA pass), zero-extend to tiles.
        xph = jnp.zeros((s, rows_pad, t_in_total), jnp.float32)
        for p in range(s):
            ph = xp2[:, p::s]
            xph = xph.at[p, :NC, :ph.shape[1]].set(ph)

        taps = (tuple(tuple((m, float(f[p + s * m])) for m in range(kp[p]))
                      for p in range(s)),)                # taps[0][p]

        y = _poly_corr(xph, taps, n_out=1, t_out_total=t_out_total,
                       row_tile=row_tile, t_out=t_out)
        out = y[0, :NC, :out_len].reshape(N, C, out_len)
        return out.astype(x.dtype)

    else:
        # F.conv_transpose1d(xp, filter, stride=s, groups=C), polyphase form.
        expected = (W - 1) * s + 1
        if padding == "valid":
            expected = expected - K + 1
        out_full_len = (L - 1) * s + K

        m_max = (K + s - 1) // s       # max taps of any phase
        pad_front = m_max - 1
        assert pad_front <= 128, "kernel_size too large for 128-lane halo"
        q_len = L + m_max - 1          # per-phase output length

        t_out = min(time_tile_cap, _round_up(q_len, 128))
        t_out_total = _round_up(q_len, t_out)
        n_t = t_out_total // t_out
        t_in_total = (n_t + 1) * t_out

        xpad = jnp.zeros((1, rows_pad, t_in_total), jnp.float32)
        xpad = xpad.at[0, :NC, pad_front:pad_front + L].set(xp2)

        taps_per_phase = []
        for r in range(s):
            m_r = (K - r + s - 1) // s
            d_r = m_max - m_r
            # flipped sub-filter: h_r[m'] = f[s*(m_r-1-m') + r], read at offset d_r+m'
            taps_per_phase.append(tuple((d_r + mp, float(f[s * (m_r - 1 - mp) + r]))
                                        for mp in range(m_r)))
        taps = tuple((tr,) for tr in taps_per_phase)      # taps[r][0]

        y = _poly_corr(xpad, taps, n_out=s, t_out_total=t_out_total,
                       row_tile=row_tile, t_out=t_out)

        # Interleave the `stride` phase outputs (out_full[s*q + r] = phase_r[q])
        # and center-crop -- single fused XLA pass.
        inter = jnp.transpose(y[:, :NC, :], (1, 2, 0)).reshape(NC, t_out_total * s)
        out_full = inter[:, :out_full_len]
        diff = out_full_len - expected
        if diff > 0:
            assert diff % 2 == 0
            out_full = out_full[:, diff // 2: out_full_len - diff // 2]
        return out_full.reshape(N, C, expected).astype(x.dtype)


# ----------------------------------------------------------------------------
# Pure-numpy references (torch semantics) for verification.
# ----------------------------------------------------------------------------
def _ref_downsample(x, f2d, K, stride):
    num_pad = (K - 1) // 2
    xp = np.pad(x, ((0, 0), (0, 0), (num_pad, num_pad)), mode="reflect")
    N, C, L = xp.shape
    out_len = (L - K) // stride + 1
    out = np.zeros((N, C, out_len), np.float32)
    for k in range(K):
        out += xp[:, :, k:k + (out_len - 1) * stride + 1:stride] * f2d[None, :, k:k + 1]
    return out


def _ref_upsample(x, f2d, K, stride):
    num_pad = (K - 1) // 2
    xp = np.pad(x, ((0, 0), (0, 0), (num_pad, num_pad)), mode="reflect")
    N, C, L = xp.shape
    out_len = (L - 1) * stride + K
    out = np.zeros((N, C, out_len), np.float32)
    for j in range(L):
        out[:, :, j * stride:j * stride + K] += xp[:, :, j:j + 1] * f2d[None, :, :]
    expected = (x.shape[2] - 1) * stride + 1
    diff = out_len - expected
    return out[:, :, diff // 2:out_len - diff // 2]


# ----------------------------------------------------------------------------
if __name__ == "__main__":
    channels, kernel_size, stride = 4, 15, 2
    N, W = 2, 17  # W % stride == 1, as required by the downsampling branch

    key = jax.random.PRNGKey(0)
    x = jax.random.normal(key, (N, channels, W), dtype=jnp.float32)
    taps_1d = sinc_lowpass_taps(kernel_size, stride)      # numpy (K,)

    # Downsampling (transpose=False, padding='reflect') -- the module default.
    out_down = resample_sinc_forward(x, taps_1d, kernel_size=kernel_size,
                                     stride=stride, padding="reflect",
                                     transpose=False)
    out_down = jax.block_until_ready(out_down)

    # Upsampling (transpose=True, padding='reflect').
    out_up = resample_sinc_forward(x, taps_1d, kernel_size=kernel_size,
                                   stride=stride, padding="reflect",
                                   transpose=True)
    out_up = jax.block_until_ready(out_up)

    # Verify against numpy references of the torch semantics.
    x_np = np.asarray(x)
    f2d_np = np.repeat(taps_1d[None, :], channels, axis=0)  # (C, K)
    ref_down = _ref_downsample(x_np, f2d_np, kernel_size, stride)
    ref_up = _ref_upsample(x_np, f2d_np, kernel_size, stride)

    assert out_down.shape == ref_down.shape, (out_down.shape, ref_down.shape)
    assert out_up.shape == ref_up.shape, (out_up.shape, ref_up.shape)
    np.testing.assert_allclose(np.asarray(out_down), ref_down, rtol=1e-5, atol=1e-5)
    np.testing.assert_allclose(np.asarray(out_up), ref_up, rtol=1e-5, atol=1e-5)

    print("KERNEL_OK")
</pallas_src>

<mosaic_0001>
module attributes {stable_mosaic.version = 11 : i64} {
  func.func @_poly_corr_kernel(%arg0: i32, %arg1: i32, %arg2: memref<2x8x128xf32, #tpu.memory_space<vmem>>, %arg3: memref<2x8x128xf32, #tpu.memory_space<vmem>>, %arg4: memref<1x8x128xf32, #tpu.memory_space<vmem>>, %arg5: memref<8x256xf32, #tpu.memory_space<vmem>>, %arg6: memref<8x256xf32, #tpu.memory_space<vmem>>) attributes {dimension_semantics = [#tpu.dimension_semantics<parallel>, #tpu.dimension_semantics<parallel>], iteration_bounds = array<i64: 1, 1>, scalar_prefetch = 0 : i64, scratch_operands = 2 : i64, tpu.core_type = #tpu.core_type<tc>, window_params = [{transform_indices = @transform_0, window_bounds = array<i64: 2, 8, 128>}, {transform_indices = @transform_1, window_bounds = array<i64: 2, 8, 128>}, {transform_indices = @transform_2, window_bounds = array<i64: 1, 8, 128>}]} {
    %c0 = arith.constant 0 : index
    %c0_0 = arith.constant 0 : index
    %c0_1 = arith.constant 0 : index
    %0 = vector.load %arg2[%c0, %c0_0, %c0_1] : memref<2x8x128xf32, #tpu.memory_space<vmem>>, vector<1x8x128xf32>
    %1 = vector.shape_cast %0 : vector<1x8x128xf32> to vector<8x128xf32>
    %c0_2 = arith.constant 0 : index
    %c0_3 = arith.constant 0 : index
    %2 = vector.load %arg5[%c0_2, %c0_3] : memref<8x256xf32, #tpu.memory_space<vmem>>, vector<8x128xf32>
    tpu.vector_store %arg5[%c0_2, %c0_3], %1 {strides = array<i32>} : memref<8x256xf32, #tpu.memory_space<vmem>>, vector<8x128xf32>,
    %c0_4 = arith.constant 0 : index
    %c0_5 = arith.constant 0 : index
    %c0_6 = arith.constant 0 : index
    %3 = vector.load %arg3[%c0_4, %c0_5, %c0_6] : memref<2x8x128xf32, #tpu.memory_space<vmem>>, vector<1x8x128xf32>
    %4 = vector.shape_cast %3 : vector<1x8x128xf32> to vector<8x128xf32>
    %c0_7 = arith.constant 0 : index
    %c128 = arith.constant 128 : index
    %5 = vector.load %arg5[%c0_7, %c128] : memref<8x256xf32, #tpu.memory_space<vmem>>, vector<8x128xf32>
    tpu.vector_store %arg5[%c0_7, %c128], %4 {strides = array<i32>} : memref<8x256xf32, #tpu.memory_space<vmem>>, vector<8x128xf32>,
    %c1 = arith.constant 1 : index
    %c0_8 = arith.constant 0 : index
    %c0_9 = arith.constant 0 : index
    %6 = vector.load %arg2[%c1, %c0_8, %c0_9] : memref<2x8x128xf32, #tpu.memory_space<vmem>>, vector<1x8x128xf32>
    %7 = vector.shape_cast %6 : vector<1x8x128xf32> to vector<8x128xf32>
    %c0_10 = arith.constant 0 : index
    %c0_11 = arith.constant 0 : index
    %8 = vector.load %arg6[%c0_10, %c0_11] : memref<8x256xf32, #tpu.memory_space<vmem>>, vector<8x128xf32>
    tpu.vector_store %arg6[%c0_10, %c0_11], %7 {strides = array<i32>} : memref<8x256xf32, #tpu.memory_space<vmem>>, vector<8x128xf32>,
    %c1_12 = arith.constant 1 : index
    %c0_13 = arith.constant 0 : index
    %c0_14 = arith.constant 0 : index
    %9 = vector.load %arg3[%c1_12, %c0_13, %c0_14] : memref<2x8x128xf32, #tpu.memory_space<vmem>>, vector<1x8x128xf32>
    %10 = vector.shape_cast %9 : vector<1x8x128xf32> to vector<8x128xf32>
    %c0_15 = arith.constant 0 : index
    %c128_16 = arith.constant 128 : index
    %11 = vector.load %arg6[%c0_15, %c128_16] : memref<8x256xf32, #tpu.memory_space<vmem>>, vector<8x128xf32>
    tpu.vector_store %arg6[%c0_15, %c128_16], %10 {strides = array<i32>} : memref<8x256xf32, #tpu.memory_space<vmem>>, vector<8x128xf32>,
    %cst = arith.constant 0.000000e+00 : f32
    %12 = vector.broadcast %cst : f32 to vector<8x128xf32>
    %c0_17 = arith.constant 0 : index
    %c0_18 = arith.constant 0 : index
    %13 = vector.load %arg5[%c0_17, %c0_18] : memref<8x256xf32, #tpu.memory_space<vmem>>, vector<8x128xf32>
    %cst_19 = arith.constant 6.3147092E-19 : f32
    %14 = vector.broadcast %cst_19 : f32 to vector<8x128xf32>
    %15 = arith.mulf %13, %14 : vector<8x128xf32>
    %16 = arith.addf %12, %15 : vector<8x128xf32>
    %c0_20 = arith.constant 0 : index
    %c1_21 = arith.constant 1 : index
    %17 = vector.load %arg5[%c0_20, %c1_21] : memref<8x256xf32, #tpu.memory_space<vmem>>, vector<8x128xf32>
    %cst_22 = arith.constant 0.0119924499 : f32
    %18 = vector.broadcast %cst_22 : f32 to vector<8x128xf32>
    %19 = arith.mulf %17, %18 : vector<8x128xf32>
    %20 = arith.addf %16, %19 : vector<8x128xf32>
    %c0_23 = arith.constant 0 : index
    %c2 = arith.constant 2 : index
    %21 = vector.load %arg5[%c0_23, %c2] : memref<8x256xf32, #tpu.memory_space<vmem>>, vector<8x128xf32>
    %cst_24 = arith.constant -0.0648987293 : f32
    %22 = vector.broadcast %cst_24 : f32 to vector<8x128xf32>
    %23 = arith.mulf %21, %22 : vector<8x128xf32>
    %24 = arith.addf %20, %23 : vector<8x128xf32>
    %c0_25 = arith.constant 0 : index
    %c3 = arith.constant 3 : index
    %25 = vector.load %arg5[%c0_25, %c3] : memref<8x256xf32, #tpu.memory_space<vmem>>, vector<8x128xf32>
    %cst_26 = arith.constant 0.302744448 : f32
    %26 = vector.broadcast %cst_26 : f32 to vector<8x128xf32>
    %27 = arith.mulf %25, %26 : vector<8x128xf32>
    %28 = arith.addf %24, %27 : vector<8x128xf32>
    %c0_27 = arith.constant 0 : index
    %c4 = arith.constant 4 : index
    %29 = vector.load %arg5[%c0_27, %c4] : memref<8x256xf32, #tpu.memory_space<vmem>>, vector<8x128xf32>
    %cst_28 = arith.constant 0.302744448 : f32
    %30 = vector.broadcast %cst_28 : f32 to vector<8x128xf32>
    %31 = arith.mulf %29, %30 : vector<8x128xf32>
    %32 = arith.addf %28, %31 : vector<8x128xf32>
    %c0_29 = arith.constant 0 : index
    %c5 = arith.constant 5 : index
    %33 = vector.load %arg5[%c0_29, %c5] : memref<8x256xf32, #tpu.memory_space<vmem>>, vector<8x128xf32>
    %cst_30 = arith.constant -0.0648987293 : f32
    %34 = vector.broadcast %cst_30 : f32 to vector<8x128xf32>
    %35 = arith.mulf %33, %34 : vector<8x128xf32>
    %36 = arith.addf %32, %35 : vector<8x128xf32>
    %c0_31 = arith.constant 0 : index
    %c6 = arith.constant 6 : index
    %37 = vector.load %arg5[%c0_31, %c6] : memref<8x256xf32, #tpu.memory_space<vmem>>, vector<8x128xf32>
    %cst_32 = arith.constant 0.0119924499 : f32
    %38 = vector.broadcast %cst_32 : f32 to vector<8x128xf32>
    %39 = arith.mulf %37, %38 : vector<8x128xf32>
    %40 = arith.addf %36, %39 : vector<8x128xf32>
    %c0_33 = arith.constant 0 : index
    %c7 = arith.constant 7 : index
    %41 = vector.load %arg5[%c0_33, %c7] : memref<8x256xf32, #tpu.memory_space<vmem>>, vector<8x128xf32>
    %cst_34 = arith.constant 6.3147092E-19 : f32
    %42 = vector.broadcast %cst_34 : f32 to vector<8x128xf32>
    %43 = arith.mulf %41, %42 : vector<8x128xf32>
    %44 = arith.addf %40, %43 : vector<8x128xf32>
    %c0_35 = arith.constant 0 : index
    %c0_36 = arith.constant 0 : index
    %45 = vector.load %arg6[%c0_35, %c0_36] : memref<8x256xf32, #tpu.memory_space<vmem>>, vector<8x128xf32>
    %cst_37 = arith.constant 9.6572561E-19 : f32
    %46 = vector.broadcast %cst_37 : f32 to vector<8x128xf32>
    %47 = arith.mulf %45, %46 : vector<8x128xf32>
    %48 = arith.addf %44, %47 : vector<8x128xf32>
    %c0_38 = arith.constant 0 : index
    %c1_39 = arith.constant 1 : index
    %49 = vector.load %arg6[%c0_38, %c1_39] : memref<8x256xf32, #tpu.memory_space<vmem>>, vector<8x128xf32>
    %cst_40 = arith.constant -7.58177206E-18 : f32
    %50 = vector.broadcast %cst_40 : f32 to vector<8x128xf32>
    %51 = arith.mulf %49, %50 : vector<8x128xf32>
    %52 = arith.addf %48, %51 : vector<8x128xf32>
    %c0_41 = arith.constant 0 : index
    %c2_42 = arith.constant 2 : index
    %53 = vector.load %arg6[%c0_41, %c2_42] : memref<8x256xf32, #tpu.memory_space<vmem>>, vector<8x128xf32>
    %cst_43 = arith.constant 1.58318465E-17 : f32
    %54 = vector.broadcast %cst_43 : f32 to vector<8x128xf32>
    %55 = arith.mulf %53, %54 : vector<8x128xf32>
    %56 = arith.addf %52, %55 : vector<8x128xf32>
    %c0_44 = arith.constant 0 : index
    %c3_45 = arith.constant 3 : index
    %57 = vector.load %arg6[%c0_44, %c3_45] : memref<8x256xf32, #tpu.memory_space<vmem>>, vector<8x128xf32>
    %cst_46 = arith.constant 0.500323653 : f32
    %58 = vector.broadcast %cst_46 : f32 to vector<8x128xf32>
    %59 = arith.mulf %57, %58 : vector<8x128xf32>
    %60 = arith.addf %56, %59 : vector<8x128xf32>
    %c0_47 = arith.constant 0 : index
    %c4_48 = arith.constant 4 : index
    %61 = vector.load %arg6[%c0_47, %c4_48] : memref<8x256xf32, #tpu.memory_space<vmem>>, vector<8x128xf32>
    %cst_49 = arith.constant 1.58318465E-17 : f32
    %62 = vector.broadcast %cst_49 : f32 to vector<8x128xf32>
    %63 = arith.mulf %61, %62 : vector<8x128xf32>
    %64 = arith.addf %60, %63 : vector<8x128xf32>
    %c0_50 = arith.constant 0 : index
    %c5_51 = arith.constant 5 : index
    %65 = vector.load %arg6[%c0_50, %c5_51] : memref<8x256xf32, #tpu.memory_space<vmem>>, vector<8x128xf32>
    %cst_52 = arith.constant -7.58177206E-18 : f32
    %66 = vector.broadcast %cst_52 : f32 to vector<8x128xf32>
    %67 = arith.mulf %65, %66 : vector<8x128xf32>
    %68 = arith.addf %64, %67 : vector<8x128xf32>
    %c0_53 = arith.constant 0 : index
    %c6_54 = arith.constant 6 : index
    %69 = vector.load %arg6[%c0_53, %c6_54] : memref<8x256xf32, #tpu.memory_space<vmem>>, vector<8x128xf32>
    %cst_55 = arith.constant 9.6572561E-19 : f32
    %70 = vector.broadcast %cst_55 : f32 to vector<8x128xf32>
    %71 = arith.mulf %69, %70 : vector<8x128xf32>
    %72 = arith.addf %68, %71 : vector<8x128xf32>
    %c0_56 = arith.constant 0 : index
    %c0_57 = arith.constant 0 : index
    %c0_58 = arith.constant 0 : index
    %73 = vector.load %arg4[%c0_56, %c0_57, %c0_58] : memref<1x8x128xf32, #tpu.memory_space<vmem>>, vector<1x8x128xf32>
    %74 = vector.shape_cast %73 : vector<1x8x128xf32> to vector<8x128xf32>
    %75 = vector.shape_cast %72 : vector<8x128xf32> to vector<1x8x128xf32>
    tpu.vector_store %arg4[%c0_56, %c0_57, %c0_58], %75 {strides = array<i32>} : memref<1x8x128xf32, #tpu.memory_space<vmem>>, vector<1x8x128xf32>,
    return
  }
  func.func @transform_0(%arg0: i32, %arg1: i32) -> (i32, i32, i32) {
    %c0_i32 = arith.constant 0 : i32
    %c0_i32_0 = arith.constant 0 : i32
    return %c0_i32, %arg0, %arg1 : i32, i32, i32
  }
  func.func @transform_1(%arg0: i32, %arg1: i32) -> (i32, i32, i32) {
    %c1_i32 = arith.constant 1 : i32
    %0 = arith.addi %arg1, %c1_i32 : i32
    %c1_i32_0 = arith.constant 1 : i32
    %1 = arith.muli %0, %c1_i32_0 : i32
    %c0_i32 = arith.constant 0 : i32
    %c0_i32_1 = arith.constant 0 : i32
    return %c0_i32, %arg0, %1 : i32, i32, i32
  }
  func.func @transform_2(%arg0: i32, %arg1: i32) -> (i32, i32, i32) {
    %c0_i32 = arith.constant 0 : i32
    %c0_i32_0 = arith.constant 0 : i32
    return %c0_i32, %arg0, %arg1 : i32, i32, i32
  }
}

</mosaic_0001>

<llo_original>
// kernel: tpu_custom_call.1
$region0: #{tpu_custom_call.1}
  #allocation0 [shape = 'u32[]', space=smem, size = 0x4, offset = 0x4, fixed_abs, tag = 'smem constant byte address 0x4 - core index']
  #allocation1 [shape = 'u32[144,128]{1,0:T(1,128)}', space=vmem, size = 0x12000, scoped, tag = 'internal scratch']
  #allocation2 [shape = 'f32[8,256]{1,0:T(8,128)}', space=vmem, size = 0x2000, scoped, tag = 'scratch operand']
  #allocation3 [shape = 'f32[8,256]{1,0:T(8,128)}', space=vmem, size = 0x2000, scoped, tag = 'scratch operand']
  %s0 = inlined_call_operand.hbm [shape: f32[2,8,256], index: 0, kind: input, shape index: {}]
  %s1 = inlined_call_operand.hbm [shape: f32[2,8,256], index: 1, kind: input, shape index: {}]
  %s2 = inlined_call_operand.hbm [shape: f32[1,8,128], index: 2, kind: output, shape index: {}]
  %s3 = sld [smem:[#allocation0]]
  $region26: #{tpu_custom_call.1} parent=0
    _
  %s5 = ssub.s32 1, %s3
  %s6 = scalar_select 0, %s5, %s3
  $region1: #{tpu_custom_call.1} parent=0
    #allocation4 [shape = 'u8[8192]{0}', space=vmem, size = 0x2000, scoped, tag = 'input window, operand 0, single buffered']
    #allocation5 [shape = 's32[1]{0}', space=sflag, size = 0x4, scoped, tag = 'scoped memory for tpu_custom_call.1']
    #allocation6 [shape = 's32[1]{0}', space=sflag, size = 0x4, scoped, tag = 'scoped memory for tpu_custom_call.1']
    #allocation7 [shape = 'u8[8192]{0}', space=vmem, size = 0x2000, scoped, tag = 'input window, operand 1, single buffered']
    #allocation8 [shape = 's32[1]{0}', space=sflag, size = 0x4, scoped, tag = 'scoped memory for tpu_custom_call.1']
    #allocation9 [shape = 'u8[4096]{0}', space=vmem, size = 0x1000, scoped, tag = 'output window, operand 0, single buffered']
    %7 = vsyncpa [#allocation5], 0
    %8 = vsyncpa [#allocation8], 0
    %9 = vsyncpa [#allocation6], 0
    // Predicated region
    $region2: #{tpu_custom_call.1} parent=1 // pred_check
      _
    $region3: #{tpu_custom_call.1} parent=1 // pred_check_branch
      %11 = sbr.rel (0) target = $region5
    $region4: #{tpu_custom_call.1} parent=1 // pred_region
      %s13 = ssub.s32 256, 256
      %14 = vsyncadd [#allocation5], %s13
      %s15 = sshll.u32 [#allocation4], 4
      %s16 = int_to_ptr.vmem [resolvable:$true] %s15
      %21 = dma.hbm_to_vmem [thread:$0]  %s0, 256, %s16, [#allocation5], 256, 128, 8
    $region5: #{tpu_custom_call.1} parent=1 // pred_fallthru
      _
    // Predicated region
    $region6: #{tpu_custom_call.1} parent=1 // pred_check
      _
    $region7: #{tpu_custom_call.1} parent=1 // pred_check_branch
      %23 = sbr.rel (0) target = $region9
    $region8: #{tpu_custom_call.1} parent=1 // pred_region
      %s24 = sadd.s32 0, 1
      %s26 = ssub.s32 256, 256
      %27 = vsyncadd [#allocation8], %s26
      %s28 = smul.addr %s24, 128
      %s29 = scalar_lea.hbm %s1, %s28
      %s30 = sshll.u32 [#allocation7], 4
      %s31 = int_to_ptr.vmem [resolvable:$true] %s30
      %36 = dma.hbm_to_vmem [thread:$0]  %s29, 256, %s31, [#allocation8], 256, 128, 8
    $region9: #{tpu_custom_call.1} parent=1 // pred_fallthru
      _
    // Predicated region
    $region10: #{tpu_custom_call.1} parent=1 // pred_check
      _
    $region11: #{tpu_custom_call.1} parent=1 // pred_check_branch
      %38 = sbr.rel (0) target = $region13
    $region12: #{tpu_custom_call.1} parent=1 // pred_region
      %39 = dma.done [#allocation5], 256
    $region13: #{tpu_custom_call.1} parent=1 // pred_fallthru
      _
    // Predicated region
    $region14: #{tpu_custom_call.1} parent=1 // pred_check
      _
    $region15: #{tpu_custom_call.1} parent=1 // pred_check_branch
      %41 = sbr.rel (0) target = $region17
    $region16: #{tpu_custom_call.1} parent=1 // pred_region
      %42 = dma.done [#allocation8], 256
    $region17: #{tpu_custom_call.1} parent=1 // pred_fallthru
      _
    %s43 = sadd.s32 0, 1
    %v44 = vld [vmem:[#allocation4] sm:$0xff]
    %45 = vst [vmem:[#allocation2] sm:$0xff] %v44
    %v46 = vld [vmem:[#allocation7] sm:$0xff]
    %47 = vst [vmem:[#allocation2 + $0x8] sm:$0xff] %v46
    %s48 = scalar_lea.vmem [#allocation4], 8
    %v49 = vld [vmem:[%s48] sm:$0xff]
    %50 = vst [vmem:[#allocation3] sm:$0xff] %v49
    %s51 = scalar_lea.vmem [#allocation7], 8
    %v52 = vld [vmem:[%s51] sm:$0xff]
    %53 = vst [vmem:[#allocation3 + $0x8] sm:$0xff] %v52
    %v54 = vld [vmem:[#allocation2] sm:$0xff]
    %v55 = vmul.f32 %v54, 6.314709e-19
    %v56 = vadd.f32 %v55, 0.0
    %v57 = vld [vmem:[#allocation2] sm:$0xff]
    %v58 = vld [vmem:[#allocation2 + $0x8] sm:$0xff]
    %v59 = vmul.f32 %v57, 0.01199245
    %v60 = vmul.f32 %v58, 0.01199245
    %63 = vrot.lane.b32.xlu0 %v59, 127
    %v64 = vpop.permute.xlu0 %63
    %65 = vrot.lane.b32.xlu0 %v60, 127
    %v66 = vpop.permute.xlu0 %65
    %vm67 = vcmask 1039360
    %v68 = vsel %vm67, %v64, %v66
    %v70 = vadd.f32 %v56, %v68
    %v71 = vmul.f32 %v57, -0.06489873
    %v72 = vmul.f32 %v58, -0.06489873
    %75 = vrot.lane.b32.xlu0 %v71, 126
    %v76 = vpop.permute.xlu0 %75
    %77 = vrot.lane.b32.xlu0 %v72, 126
    %v78 = vpop.permute.xlu0 %77
    %vm79 = vcmask 1031168
    %v80 = vsel %vm79, %v76, %v78
    %v82 = vadd.f32 %v70, %v80
    %v83 = vmul.f32 %v57, 0.30274445
    %v84 = vmul.f32 %v58, 0.30274445
    %87 = vrot.lane.b32.xlu0 %v83, 125
    %v88 = vpop.permute.xlu0 %87
    %89 = vrot.lane.b32.xlu0 %v84, 125
    %v90 = vpop.permute.xlu0 %89
    %vm91 = vcmask 1022976
    %v92 = vsel %vm91, %v88, %v90
    %v94 = vadd.f32 %v82, %v92
    %95 = vrot.lane.b32.xlu0 %v83, 124
    %v96 = vpop.permute.xlu0 %95
    %97 = vrot.lane.b32.xlu0 %v84, 124
    %v98 = vpop.permute.xlu0 %97
    %vm99 = vcmask 1014784
    %v100 = vsel %vm99, %v96, %v98
    %v102 = vadd.f32 %v94, %v100
    %103 = vrot.lane.b32.xlu0 %v71, 123
    %v104 = vpop.permute.xlu0 %103
    %105 = vrot.lane.b32.xlu0 %v72, 123
    %v106 = vpop.permute.xlu0 %105
    %vm107 = vcmask 1006592
    %v108 = vsel %vm107, %v104, %v106
    %v110 = vadd.f32 %v102, %v108
    %111 = vrot.lane.b32.xlu0 %v59, 122
    %v112 = vpop.permute.xlu0 %111
    %113 = vrot.lane.b32.xlu0 %v60, 122
    %v114 = vpop.permute.xlu0 %113
    %vm115 = vcmask 998400
    %v116 = vsel %vm115, %v112, %v114
    %v118 = vadd.f32 %v110, %v116
    %v119 = vmul.f32 %v57, 6.314709e-19
    %v120 = vmul.f32 %v58, 6.314709e-19
    %123 = vrot.lane.b32.xlu0 %v119, 121
    %v124 = vpop.permute.xlu0 %123
    %125 = vrot.lane.b32.xlu0 %v120, 121
    %v126 = vpop.permute.xlu0 %125
    %vm127 = vcmask 990208
    %v128 = vsel %vm127, %v124, %v126
    %v130 = vadd.f32 %v118, %v128
    %v131 = vld [vmem:[#allocation3] sm:$0xff]
    %v132 = vmul.f32 %v131, 9.657256e-19
    %v133 = vadd.f32 %v130, %v132
    %v134 = vld [vmem:[#allocation3] sm:$0xff]
    %v135 = vld [vmem:[#allocation3 + $0x8] sm:$0xff]
    %v136 = vmul.f32 %v134, -7.581772e-18
    %v137 = vmul.f32 %v135, -7.581772e-18
    %140 = vrot.lane.b32.xlu0 %v136, 127
    %v141 = vpop.permute.xlu0 %140
    %142 = vrot.lane.b32.xlu0 %v137, 127
    %v143 = vpop.permute.xlu0 %142
    %v144 = vsel %vm67, %v141, %v143
    %v146 = vadd.f32 %v133, %v144
    %v147 = vmul.f32 %v134, 1.5831846e-17
    %v148 = vmul.f32 %v135, 1.5831846e-17
    %151 = vrot.lane.b32.xlu0 %v147, 126
    %v152 = vpop.permute.xlu0 %151
    %153 = vrot.lane.b32.xlu0 %v148, 126
    %v154 = vpop.permute.xlu0 %153
    %v155 = vsel %vm79, %v152, %v154
    %v157 = vadd.f32 %v146, %v155
    %v158 = vmul.f32 %v134, 0.50032365
    %v159 = vmul.f32 %v135, 0.50032365
    %162 = vrot.lane.b32.xlu0 %v158, 125
    %v163 = vpop.permute.xlu0 %162
    %164 = vrot.lane.b32.xlu0 %v159, 125
    %v165 = vpop.permute.xlu0 %164
    %v166 = vsel %vm91, %v163, %v165
    %v168 = vadd.f32 %v157, %v166
    %169 = vrot.lane.b32.xlu0 %v147, 124
    %v170 = vpop.permute.xlu0 %169
    %171 = vrot.lane.b32.xlu0 %v148, 124
    %v172 = vpop.permute.xlu0 %171
    %v173 = vsel %vm99, %v170, %v172
    %v175 = vadd.f32 %v168, %v173
    %176 = vrot.lane.b32.xlu0 %v136, 123
    %v177 = vpop.permute.xlu0 %176
    %178 = vrot.lane.b32.xlu0 %v137, 123
    %v179 = vpop.permute.xlu0 %178
    %v180 = vsel %vm107, %v177, %v179
    %v182 = vadd.f32 %v175, %v180
    %v183 = vmul.f32 %v134, 9.657256e-19
    %v184 = vmul.f32 %v135, 9.657256e-19
    %187 = vrot.lane.b32.xlu0 %v183, 122
    %v188 = vpop.permute.xlu0 %187
    %189 = vrot.lane.b32.xlu0 %v184, 122
    %v190 = vpop.permute.xlu0 %189
    %v191 = vsel %vm115, %v188, %v190
    %v193 = vadd.f32 %v182, %v191
    %194 = vst [vmem:[#allocation9] sm:$0xff] %v193
    // Predicated region
    $region18: #{tpu_custom_call.1} parent=1 // pred_check
      _
    $region19: #{tpu_custom_call.1} parent=1 // pred_check_branch
      %196 = sbr.rel (0) target = $region21
    $region20: #{tpu_custom_call.1} parent=1 // pred_region
      %s198 = ssub.s32 128, 128
      %199 = vsyncadd [#allocation6], %s198
      %s201 = sshll.u32 [#allocation9], 4
      %s202 = int_to_ptr.vmem [resolvable:$true] %s201
      %204 = dma.vmem_to_hbm [thread:$0]  %s202, 128, %s2, [#allocation6]
    $region21: #{tpu_custom_call.1} parent=1 // pred_fallthru
      _
    // Predicated region
    $region22: #{tpu_custom_call.1} parent=1 // pred_check
      _
    $region23: #{tpu_custom_call.1} parent=1 // pred_check_branch
      %206 = sbr.rel (0) target = $region25
    $region24: #{tpu_custom_call.1} parent=1 // pred_region
      %207 = dma.done [#allocation6], 128
    $region25: #{tpu_custom_call.1} parent=1 // pred_fallthru
      _
    %208 = vsyncpa [#allocation5], 1
    %209 = vsyncpa [#allocation8], 1
    %210 = vsyncpa [#allocation6], 1

</llo_original>
